<compile_context>
chip_gen: v7x
topology: tpu7x:2x2x1
jax: 0.10.0
libtpu: 0.0.40
codegen_flags: <defaults>
</compile_context>

<pallas_src>
import math
from functools import partial

import jax
import jax.numpy as jnp
from jax import lax
from jax.experimental import pallas as pl
from jax.experimental.pallas import tpu as pltpu


# Batch tile for the gridded path. Multiple of 128 keeps the output store
# unmasked. Per-step VMEM: x tile TB x pad(D->128 lanes) x 4 B (double-buffered)
# + tiny resident weights + (1, TB) output -> ~0.5 MiB at TB=512, comfortably
# inside v5e's 16 MiB scoped default and v7x's 64 MiB physical VMEM. For pure
# throughput runs raise to 8192-32768 (and set vmem_limit_bytes if needed).
BATCH_TILE = 512


def mlp_kernel(x_ref, w1_ref, b1_ref, w2_ref, b2_ref, out_ref):
    # x: (TB, D), w1: (H, D), b1: (H, 1), w2: (H, 1), b2: (1,) in SMEM, out: (1, TB)
    # fc1: contract D on both operands -> (H, TB), batch lane-dense, f32 MXU acc.
    # TODO(synk): on v6e/v7x pass x/w1 as bf16 for the MXU (keep f32 acc) when
    # the ~1e-3 relative error is acceptable; left f32 here to match the ref check.
    h = lax.dot_general(
        w1_ref[...], x_ref[...],
        dimension_numbers=(((1,), (1,)), ((), ())),
        preferred_element_type=jnp.float32,
    )                                                      # (H, TB)
    h = jnp.maximum(h + b1_ref[...], 0.0)                  # bias + ReLU (VPU), f32
    # fc2: output width 1 -> skip the MXU; VPU multiply + cross-sublane reduce (XLU).
    y = jnp.sum(h * w2_ref[...], axis=0, keepdims=True)    # (1, TB), lane-dense
    out_ref[...] = (y + b2_ref[0]).astype(out_ref.dtype)   # scalar bias from SMEM


def pack_params(w1, b1, w2, b2):
    """One-time reshape of torch-layout params into kernel-ready layout.

    w1: (H, D), b1: (H,), w2: (1, H), b2: (1,)  ->  (w1, b1 (H,1), w2 (H,1), b2).
    Hoisted out of the per-call path so the jitted forward has no reshape ops.
    """
    H = w1.shape[0]
    return w1, b1.reshape(H, 1), w2.reshape(H, 1), b2


@jax.jit
def network_forward(x, params):
    """Pallas forward of Network: fc2(relu(fc1(x))). x: (B, D) -> (B, 1)."""
    w1, b1_col, w2_col, b2 = params
    B, D = x.shape
    H = w1.shape[0]

    vmem = pl.BlockSpec(memory_space=pltpu.MemorySpace.VMEM)
    smem = pl.BlockSpec(memory_space=pltpu.MemorySpace.SMEM)

    if B % BATCH_TILE == 0 and B >= 2 * BATCH_TILE:
        # Tiled path: grid over the batch axis only; weights/biases resident
        # (constant index_map), x streamed per tile, output lane-dense (1, TB).
        grid = (B // BATCH_TILE,)
        out_row = pl.pallas_call(
            mlp_kernel,
            out_shape=jax.ShapeDtypeStruct((1, B), x.dtype),
            grid=grid,
            in_specs=[
                pl.BlockSpec((BATCH_TILE, D), lambda i: (i, 0)),  # x tile
                pl.BlockSpec((H, D), lambda i: (0, 0)),           # w1 resident
                pl.BlockSpec((H, 1), lambda i: (0, 0)),           # b1 resident
                pl.BlockSpec((H, 1), lambda i: (0, 0)),           # w2 resident
                smem,                                             # b2 scalar
            ],
            out_specs=pl.BlockSpec((1, BATCH_TILE), lambda i: (0, i)),
            compiler_params=pltpu.CompilerParams(
                dimension_semantics=("parallel",)),               # 2 TCs on v7x
        )(x, w1, b1_col, w2_col, b2)
    else:
        # Grid-less path for small B: everything fits in a fraction of one vreg;
        # any grid would only add per-step pipeline bookkeeping.
        out_row = pl.pallas_call(
            mlp_kernel,
            out_shape=jax.ShapeDtypeStruct((1, B), x.dtype),
            in_specs=[vmem, vmem, vmem, vmem, smem],
            out_specs=vmem,
        )(x, w1, b1_col, w2_col, b2)

    return out_row.reshape(B, 1)


def init_params(key, dim, hidden_size, dtype=jnp.float32):
    """Deterministic init mimicking torch.nn.Linear defaults, in torch layout."""
    k1, k2, k3, k4 = jax.random.split(key, 4)
    bound1 = 1.0 / math.sqrt(dim)
    bound2 = 1.0 / math.sqrt(hidden_size)
    w1 = jax.random.uniform(k1, (hidden_size, dim), dtype, -bound1, bound1)  # (H, D)
    b1 = jax.random.uniform(k2, (hidden_size,), dtype, -bound1, bound1)      # (H,)
    w2 = jax.random.uniform(k3, (1, hidden_size), dtype, -bound2, bound2)    # (1, H)
    b2 = jax.random.uniform(k4, (1,), dtype, -bound2, bound2)                # (1,)
    return w1, b1, w2, b2


if __name__ == "__main__":
    dim = 20
    hidden_size = 10
    batch = 8

    key = jax.random.PRNGKey(0)
    k_x, k_p, k_xl = jax.random.split(key, 3)
    x = jax.random.normal(k_x, (batch, dim), jnp.float32)
    w1, b1, w2, b2 = init_params(k_p, dim, hidden_size)
    params = pack_params(w1, b1, w2, b2)   # one-time; out of the per-call path

    # Small-batch (grid-less) path.
    out = network_forward(x, params)
    jax.block_until_ready(out)
    ref = jnp.maximum(x @ w1.T + b1, 0.0) @ w2.T + b2
    assert out.shape == (batch, 1)
    assert jnp.allclose(out, ref, atol=1e-5, rtol=1e-5)

    # Exercise the batch-tiled (large-B) path once as well.
    big_b = 2 * BATCH_TILE
    x_big = jax.random.normal(k_xl, (big_b, dim), jnp.float32)
    out_big = network_forward(x_big, params)
    jax.block_until_ready(out_big)
    ref_big = jnp.maximum(x_big @ w1.T + b1, 0.0) @ w2.T + b2
    assert out_big.shape == (big_b, 1)
    assert jnp.allclose(out_big, ref_big, atol=1e-4, rtol=1e-4)

    print("KERNEL_OK")
</pallas_src>

<mosaic_0001>
module attributes {stable_mosaic.version = 11 : i64} {
  func.func @mlp_kernel(%arg0: memref<8x20xf32, #tpu.memory_space<vmem>>, %arg1: memref<10x20xf32, #tpu.memory_space<vmem>>, %arg2: memref<10x1xf32, #tpu.memory_space<vmem>>, %arg3: memref<10x1xf32, #tpu.memory_space<vmem>>, %arg4: memref<1xf32, #tpu.memory_space<smem>>, %arg5: memref<1x8xf32, #tpu.memory_space<vmem>>) attributes {dimension_semantics = [], scalar_prefetch = 0 : i64, scratch_operands = 0 : i64, tpu.core_type = #tpu.core_type<tc>} {
    %c0 = arith.constant 0 : index
    %c0_0 = arith.constant 0 : index
    %0 = vector.load %arg1[%c0, %c0_0] : memref<10x20xf32, #tpu.memory_space<vmem>>, vector<10x20xf32>
    %c0_1 = arith.constant 0 : index
    %c0_2 = arith.constant 0 : index
    %1 = vector.load %arg0[%c0_1, %c0_2] : memref<8x20xf32, #tpu.memory_space<vmem>>, vector<8x20xf32>
    %cst = arith.constant dense<0.000000e+00> : vector<10x8xf32>
    %2 = tpu.matmul %0, %1, %cst {dimension_numbers = #tpu.dot_dimension_numbers<[1], [1], [0], [0], [0, 0, 1, 0], [], []>} : vector<10x20xf32>, vector<8x20xf32>, vector<10x8xf32> -> vector<10x8xf32>
    %c0_3 = arith.constant 0 : index
    %c0_4 = arith.constant 0 : index
    %3 = vector.load %arg2[%c0_3, %c0_4] : memref<10x1xf32, #tpu.memory_space<vmem>>, vector<10x1xf32>
    %4 = vector.broadcast %3 : vector<10x1xf32> to vector<10x8xf32>
    %5 = arith.addf %2, %4 : vector<10x8xf32>
    %cst_5 = arith.constant 0.000000e+00 : f32
    %6 = vector.broadcast %cst_5 : f32 to vector<10x8xf32>
    %7 = arith.maximumf %5, %6 : vector<10x8xf32>
    %c0_6 = arith.constant 0 : index
    %c0_7 = arith.constant 0 : index
    %8 = vector.load %arg3[%c0_6, %c0_7] : memref<10x1xf32, #tpu.memory_space<vmem>>, vector<10x1xf32>
    %9 = vector.broadcast %8 : vector<10x1xf32> to vector<10x8xf32>
    %10 = arith.mulf %7, %9 : vector<10x8xf32>
    %cst_8 = arith.constant dense<0.000000e+00> : vector<8xf32>
    %11 = vector.multi_reduction <add>, %10, %cst_8 [0] : vector<10x8xf32> to vector<8xf32>
    %12 = vector.shape_cast %11 : vector<8xf32> to vector<1x8xf32>
    %c0_9 = arith.constant 0 : index
    %13 = memref.load %arg4[%c0_9] : memref<1xf32, #tpu.memory_space<smem>>
    %14 = vector.broadcast %13 : f32 to vector<1x8xf32>
    %15 = arith.addf %12, %14 : vector<1x8xf32>
    %c0_10 = arith.constant 0 : index
    %c0_11 = arith.constant 0 : index
    %16 = vector.load %arg5[%c0_10, %c0_11] : memref<1x8xf32, #tpu.memory_space<vmem>>, vector<1x8xf32>
    tpu.vector_store %arg5[%c0_10, %c0_11], %15 {strides = array<i32>} : memref<1x8xf32, #tpu.memory_space<vmem>>, vector<1x8xf32>,
    return
  }
}

</mosaic_0001>

<llo_original>
// kernel: network_forward.1
$region0: #{network_forward.1}
  #allocation0 [shape = 'u32[]', space=smem, size = 0x4, offset = 0x4, fixed_abs, tag = 'smem constant byte address 0x4 - core index']
  #allocation1 [shape = 'u32[144,128]{1,0:T(1,128)}', space=vmem, size = 0x12000, scoped, tag = 'internal scratch']
  #allocation2 [shape = 'f32[1]{0:T(128)S(6)}', space=smem, size = 0x200, scoped, tag = 'scoped memory for network_forward.1']
  %s0 = inlined_call_operand.vmem [shape: f32[8,20], index: 0, kind: input, shape index: {}]
  %s1 = inlined_call_operand.vmem [shape: f32[10,20], index: 1, kind: input, shape index: {}]
  %s2 = inlined_call_operand.vmem [shape: f32[10,1], index: 2, kind: input, shape index: {}]
  %s3 = inlined_call_operand.vmem [shape: f32[10,1], index: 3, kind: input, shape index: {}]
  %s4 = inlined_call_operand.<no memory space> [shape: f32[1], index: 4, kind: input, shape index: {}]
  %s5 = inlined_call_operand.hbm [shape: f32[1,8], index: 5, kind: output, shape index: {}]
  %s6 = sld [smem:[#allocation0]]
  $region30: #{network_forward.1} parent=0
    _
  %s8 = ssub.s32 1, %s6
  %s9 = scalar_select 0, %s8, %s6
  %10 = sst [smem:[#allocation2]] %s4
  $region1: #{network_forward.1} parent=0
    #allocation3 [shape = 'u8[512]{0}', space=vmem, size = 0x400, scoped, tag = 'output window, operand 0, single buffered']
    #allocation4 [shape = 's32[1]{0}', space=sflag, size = 0x4, scoped, tag = 'scoped memory for network_forward.1']
    %11 = vsyncpa [#allocation4], 0
    // Predicated region
    $region2: #{network_forward.1} parent=1 // pred_check
      _
    $region3: #{network_forward.1} parent=1 // pred_check_branch
      %13 = sbr.rel (0) target = $region5
    $region4: #{network_forward.1} parent=1 // pred_region
      _
    $region5: #{network_forward.1} parent=1 // pred_fallthru
      _
    // Predicated region
    $region6: #{network_forward.1} parent=1 // pred_check
      _
    $region7: #{network_forward.1} parent=1 // pred_check_branch
      %15 = sbr.rel (0) target = $region9
    $region8: #{network_forward.1} parent=1 // pred_region
      _
    $region9: #{network_forward.1} parent=1 // pred_fallthru
      _
    // Predicated region
    $region10: #{network_forward.1} parent=1 // pred_check
      _
    $region11: #{network_forward.1} parent=1 // pred_check_branch
      %17 = sbr.rel (0) target = $region13
    $region12: #{network_forward.1} parent=1 // pred_region
      _
    $region13: #{network_forward.1} parent=1 // pred_fallthru
      _
    // Predicated region
    $region14: #{network_forward.1} parent=1 // pred_check
      _
    $region15: #{network_forward.1} parent=1 // pred_check_branch
      %19 = sbr.rel (0) target = $region17
    $region16: #{network_forward.1} parent=1 // pred_region
      _
    $region17: #{network_forward.1} parent=1 // pred_fallthru
      _
    // Predicated region
    $region18: #{network_forward.1} parent=1 // pred_check
      _
    $region19: #{network_forward.1} parent=1 // pred_check_branch
      %21 = sbr.rel (0) target = $region21
    $region20: #{network_forward.1} parent=1 // pred_region
      _
    $region21: #{network_forward.1} parent=1 // pred_fallthru
      _
    %v22 = vld [vmem:[%s1] sm:$0xff]
    %v23 = vld [vmem:[%s1 + $0x8] sm:$0x3]
    %v24 = vld [vmem:[%s0] sm:$0xff]
    %v25 = vld [vmem:[%s2] sm:$0xff]
    %v26 = vld [vmem:[%s2 + $0x8] sm:$0x3]
    %28 = vset.pattern.permute.xlu0 0
    %29 = vperm.xlu0 %28, %v25
    %v30 = vpop.permute.xlu0 %29
    %33 = vset.pattern.permute.xlu0 0
    %34 = vperm.xlu0 %33, %v26
    %v35 = vpop.permute.xlu0 %34
    %vm37 = vcmask 162816
    %v39 = vsel %vm37, %v22, 0
    %v42 = vsel %vm37, %v23, 0
    %v45 = vsel %vm37, %v24, 0
    %47 = vmatprep.subr.mxu0 0.0
    %48 = vmatpush1.xpose.msra.mxu0 %v45
    %49 = vmatprep.subr.mxu0 0.0
    %50 = vmatpush1.xpose.msra.mxu0 0.0
    %51 = vmatprep.subr.mxu0 0.0
    %52 = vmatpush1.xpose.msra.mxu0 0.0
    %53 = vmatprep.subr.mxu0 0.0
    %54 = vmatpush1.xpose.msra.mxu0 0.0
    %55 = vmatprep.subr.mxu0 0.0
    %56 = vmatpush1.xpose.msra.mxu0 0.0
    %57 = vmatprep.subr.mxu0 0.0
    %58 = vmatpush1.xpose.msra.mxu0 0.0
    %59 = vmatprep.subr.mxu0 0.0
    %60 = vmatpush1.xpose.msra.mxu0 0.0
    %61 = vmatprep.subr.mxu0 0.0
    %62 = vmatpush1.xpose.msra.mxu0 0.0
    %63 = vmatprep.subr.mxu0 0.0
    %64 = vmatpush1.xpose.msra.mxu0 0.0
    %65 = vmatprep.subr.mxu0 0.0
    %66 = vmatpush1.xpose.msra.mxu0 0.0
    %67 = vmatprep.subr.mxu0 0.0
    %68 = vmatpush1.xpose.msra.mxu0 0.0
    %69 = vmatprep.subr.mxu0 0.0
    %70 = vmatpush1.xpose.msra.mxu0 0.0
    %71 = vmatprep.subr.mxu0 0.0
    %72 = vmatpush1.xpose.msra.mxu0 0.0
    %73 = vmatprep.subr.mxu0 0.0
    %74 = vmatpush1.xpose.msra.mxu0 0.0
    %75 = vmatprep.subr.mxu0 0.0
    %76 = vmatpush1.xpose.msra.mxu0 0.0
    %77 = vmatprep.subr.mxu0 0.0
    %78 = vmatpush1.xpose.msra.mxu0 0.0
    %79 = vmatprep.subr.mxu0 0.0
    %80 = vmatpush1.xpose.msra.mxu0 0.0
    %81 = vmatprep.subr.mxu0 0.0
    %82 = vmatpush1.xpose.msra.mxu0 0.0
    %83 = vmatprep.subr.mxu0 0.0
    %84 = vmatpush1.xpose.msra.mxu0 0.0
    %85 = vmatprep.subr.mxu0 0.0
    %86 = vmatpush1.xpose.msra.mxu0 0.0
    %87 = vmatprep.subr.mxu0 0.0
    %88 = vmatpush1.xpose.msra.mxu0 0.0
    %89 = vmatprep.subr.mxu0 0.0
    %90 = vmatpush1.xpose.msra.mxu0 0.0
    %91 = vmatprep.subr.mxu0 0.0
    %92 = vmatpush1.xpose.msra.mxu0 0.0
    %93 = vmatprep.subr.mxu0 0.0
    %94 = vmatpush1.xpose.msra.mxu0 0.0
    %95 = vmatprep.subr.mxu0 0.0
    %96 = vmatpush1.xpose.msra.mxu0 0.0
    %97 = vmatprep.subr.mxu0 0.0
    %98 = vmatpush1.xpose.msra.mxu0 0.0
    %99 = vmatprep.subr.mxu0 0.0
    %100 = vmatpush1.xpose.msra.mxu0 0.0
    %101 = vmatprep.subr.mxu0 0.0
    %102 = vmatpush1.xpose.msra.mxu0 0.0
    %103 = vmatprep.subr.mxu0 0.0
    %104 = vmatpush1.xpose.msra.mxu0 0.0
    %105 = vmatprep.subr.mxu0 0.0
    %106 = vmatpush1.xpose.msra.mxu0 0.0
    %107 = vmatprep.subr.mxu0 0.0
    %108 = vmatpush1.xpose.msra.mxu0 0.0
    %109 = vmatprep.subr.mxu0 0.0
    %110 = vmatpush1.xpose.msra.mxu0 0.0
    %111 = vmatprep.mubr.f32.mxu0 0.0
    %112 = vmatmul.mubr.f32.gmra.mrb[0].mxu0 %v39
    %v113 = vpop.f32.mrb[0].mxu0
    %v114 = vadd.f32 %v30, %v113
    %v115 = vpop.f32.mrb[0].mxu0
    %116 = vmatprep.mubr.f32.mxu0 0.0
    %117 = vmatmul.mubr.f32.gmra.mrb[0].mxu0 %v42
    %v118 = vpop.f32.mrb[0].mxu0
    %v119 = vadd.f32 %v35, %v118
    %v120 = vpop.f32.mrb[0].mxu0
    %121 = vdwg.mxu0
    %v122 = vmax.f32 %v114, 0.0
    %v123 = vmax.f32 %v119, 0.0
    %v124 = vld [vmem:[%s3] sm:$0xff]
    %v125 = vld [vmem:[%s3 + $0x8] sm:$0x3]
    %127 = vset.pattern.permute.xlu0 0
    %128 = vperm.xlu0 %127, %v124
    %v129 = vpop.permute.xlu0 %128
    %132 = vset.pattern.permute.xlu0 0
    %133 = vperm.xlu0 %132, %v125
    %v134 = vpop.permute.xlu0 %133
    %v136 = vmul.f32 %v122, %v129
    %v137 = vmul.f32 %v123, %v134
    %vm138 = vcmask 64512
    %v139 = vsel %vm138, %v136, 0.0
    %vm140 = vcmask 58368
    %v141 = vsel %vm140, %v137, 0.0
    %v142 = vadd.f32 %v139, %v141
    %v143 = vrot.slane %v142, 4
    %v144 = vadd.f32 %v142, %v143
    %v145 = vrot.slane %v144, 2
    %v146 = vadd.f32 %v144, %v145
    %v147 = vrot.slane %v146, 1
    %v148 = vadd.f32 %v146, %v147
    %s149 = sld [smem:[#allocation2]]
    %v150 = vstv %s149
    %v151 = vadd.f32 %v148, %v150
    %vm152 = vcmask 57344
    %153 = vst.msk [vmem:[#allocation3] sm:$0x1] %vm152, %v151
    // Predicated region
    $region22: #{network_forward.1} parent=1 // pred_check
      _
    $region23: #{network_forward.1} parent=1 // pred_check_branch
      %155 = sbr.rel (0) target = $region25
    $region24: #{network_forward.1} parent=1 // pred_region
      %s157 = ssub.s32 16, 16
      %158 = vsyncadd [#allocation4], %s157
      %s160 = sshll.u32 [#allocation3], 4
      %s161 = int_to_ptr.vmem [resolvable:$true] %s160
      %163 = dma.vmem_to_hbm [thread:$0]  %s161, 16, %s5, [#allocation4]
    $region25: #{network_forward.1} parent=1 // pred_fallthru
      _
    // Predicated region
    $region26: #{network_forward.1} parent=1 // pred_check
      _
    $region27: #{network_forward.1} parent=1 // pred_check_branch
      %165 = sbr.rel (0) target = $region29
    $region28: #{network_forward.1} parent=1 // pred_region
      %166 = dma.done [#allocation4], 16
    $region29: #{network_forward.1} parent=1 // pred_fallthru
      _
    %167 = vsyncpa [#allocation4], 1

</llo_original>
